<compile_context>
chip_gen: v6e
topology: v6e:2x2x1
jax: 0.10.0
libtpu: 0.0.40
codegen_flags: <defaults>
</compile_context>

<pallas_src>
import functools

import jax
import jax.numpy as jnp
from jax.experimental import pallas as pl
from jax.experimental.pallas import tpu as pltpu


def _round_up(x, m):
    return ((x + m - 1) // m) * m


# -----------------------------------------------------------------------------
# Fused kernel: conv(one lane-dense MXU matmul, bias folded) + ReLU + FC
#   patches_t : (KROWS, B*HW) bf16   im2col^T, row K = ones (conv-bias row)
#   wct       : (Cout, KROWS) bf16   conv weight^T, col K = conv bias
#   wfc       : (N, Cout, HW) f32    fc weight, PyTorch (c,h,w) order == (c,p)
#   bfc       : (1, N)        f32
#   out       : (B, N)        f32
# -----------------------------------------------------------------------------
def _fused_kernel(patches_ref, wct_ref, wfc_ref, bfc_ref, o_ref, *, B, HW, N):
    # Conv as one MXU matmul: (Cout, KROWS) @ (KROWS, B*HW) -> (Cout, B*HW), f32 acc.
    feat = jnp.dot(wct_ref[...], patches_ref[...],
                   preferred_element_type=jnp.float32)
    feat = jnp.maximum(feat, 0.0)                        # ReLU (bias already folded)

    # FC: out[b, n] = sum_{c,p} feat[c, b*HW + p] * wfc[n, c, p] + bfc[n]
    # feat columns per batch segment are already in PyTorch (c, h, w) flatten order,
    # so wfc is used un-permuted and un-broadcast; batch segments are static,
    # 128-aligned lane slices (HW = 256). Elementwise stage runs on full 128-lane
    # vregs in f32 (VPU), reductions go to the XLU.
    rows = []
    for b in range(B):
        feat_b = feat[:, b * HW:(b + 1) * HW]            # (Cout, HW) static slice
        vals = [jnp.sum(feat_b * wfc_ref[n], keepdims=True)   # (1, 1)
                for n in range(N)]
        rows.append(jnp.concatenate(vals, axis=1))       # (1, N)
    o_ref[...] = jnp.concatenate(rows, axis=0) + bfc_ref[...]


# -----------------------------------------------------------------------------
# One-time parameter re-layout (hoisted out of the per-call forward).
# -----------------------------------------------------------------------------
def prepare_params(params):
    cout, cin, kh, kw = params["conv_w"].shape
    n_classes, fan_in = params["fc_w"].shape
    hw = fan_in // cout
    k = kh * kw * cin                                    # 36
    krows = _round_up(k + 1, 8)                          # + bias row, sublane aligned

    # conv weight -> (Cout, K) with columns ordered (ky, kx, cin); append conv bias
    # as an extra column (matched by the all-ones row of patches^T); pad; bf16.
    wct = jnp.transpose(params["conv_w"], (2, 3, 1, 0)).reshape(k, cout).T
    wct = jnp.concatenate([wct, params["conv_b"][:, None]], axis=1)       # (Cout, K+1)
    wct = jnp.pad(wct, ((0, 0), (0, krows - (k + 1)))).astype(jnp.bfloat16)

    # fc weight: PyTorch flatten order (c, h, w) == (c, p) -> plain reshape, f32.
    wfc = params["fc_w"].reshape(n_classes, cout, hw)
    bfc = params["fc_b"].reshape(1, n_classes)
    return {"wct": wct, "wfc": wfc, "bfc": bfc}


def self_supervised_task_forward(image_nchw, prepped):
    """image_nchw: (B, Cin, H, W) float32 -> (B, 2) float32."""
    B, Cin, H, W = image_nchw.shape
    wct, wfc, bfc = prepped["wct"], prepped["wfc"], prepped["bfc"]
    Cout, KROWS = wct.shape
    N, _, HW = wfc.shape
    K = 3 * 3 * Cin
    assert HW == H * W

    # im2col (zero padding folded in), transposed so B*HW sits in the lane dim
    # (lane-dense MXU operand), with the conv-bias ones row appended; bf16 halves
    # the dominant DMA bytes while keeping f32 accumulation in the kernel.
    x_nhwc = jnp.transpose(image_nchw, (0, 2, 3, 1))
    x_pad = jnp.pad(x_nhwc, ((0, 0), (1, 1), (1, 1), (0, 0)))
    taps = [x_pad[:, ky:ky + H, kx:kx + W, :]
            for ky in range(3) for kx in range(3)]
    patches = jnp.concatenate(taps, axis=-1).reshape(B * HW, K)          # (B*HW, 36)
    patches_t = jnp.concatenate(
        [patches.T, jnp.ones((1, B * HW), jnp.float32)], axis=0)         # bias row
    patches_t = jnp.pad(patches_t, ((0, KROWS - (K + 1)), (0, 0)))
    patches_t = patches_t.astype(jnp.bfloat16)                           # (KROWS, B*HW)

    kernel = functools.partial(_fused_kernel, B=B, HW=HW, N=N)
    vmem = pl.BlockSpec(memory_space=pltpu.MemorySpace.VMEM)
    return pl.pallas_call(
        kernel,
        out_shape=jax.ShapeDtypeStruct((B, N), jnp.float32),
        in_specs=[vmem, vmem, vmem, vmem],
        out_specs=vmem,
    )(patches_t, wct, wfc, bfc)


# -----------------------------------------------------------------------------
# Pure-JAX reference (f32, HIGHEST precision) and param init
# -----------------------------------------------------------------------------
def _reference_forward(image_nchw, params):
    feat = jax.lax.conv_general_dilated(
        image_nchw, params["conv_w"], window_strides=(1, 1), padding="SAME",
        dimension_numbers=("NCHW", "OIHW", "NCHW"),
        precision=jax.lax.Precision.HIGHEST)
    feat = jnp.maximum(feat + params["conv_b"][None, :, None, None], 0.0)
    flat = feat.reshape(image_nchw.shape[0], -1)
    return jnp.dot(flat, params["fc_w"].T,
                   precision=jax.lax.Precision.HIGHEST) + params["fc_b"]


def init_params(key, cin=4, cout=32, h=16, w=16, n_classes=2):
    """Deterministic PyTorch-style uniform(-1/sqrt(fan_in), 1/sqrt(fan_in))."""
    k1, k2, k3, k4 = jax.random.split(key, 4)
    conv_bound = 1.0 / jnp.sqrt(cin * 3 * 3)
    fc_fan_in = cout * h * w
    fc_bound = 1.0 / jnp.sqrt(fc_fan_in)
    return {
        "conv_w": jax.random.uniform(k1, (cout, cin, 3, 3), jnp.float32,
                                     -conv_bound, conv_bound),
        "conv_b": jax.random.uniform(k2, (cout,), jnp.float32,
                                     -conv_bound, conv_bound),
        "fc_w": jax.random.uniform(k3, (n_classes, fc_fan_in), jnp.float32,
                                   -fc_bound, fc_bound),
        "fc_b": jax.random.uniform(k4, (n_classes,), jnp.float32,
                                   -fc_bound, fc_bound),
    }


if __name__ == "__main__":
    key = jax.random.PRNGKey(0)
    pkey, xkey = jax.random.split(key)

    params = init_params(pkey)
    # NCHW input, as the PyTorch module expects: batch=2, channels=4, 16x16
    image = jax.random.normal(xkey, (2, 4, 16, 16), jnp.float32)

    prepped = prepare_params(params)   # one-time layout work, outside the hot path
    fwd = jax.jit(self_supervised_task_forward)
    out = jax.block_until_ready(fwd(image, prepped))
    assert out.shape == (2, 2) and out.dtype == jnp.float32

    # Tolerance covers the intentional bf16 cast of the conv MXU operands
    # (accumulation stays f32); the FC stage is exact f32.
    ref = jax.block_until_ready(jax.jit(_reference_forward)(image, params))
    assert jnp.allclose(out, ref, rtol=2e-2, atol=2e-2), (out, ref)

    print("KERNEL_OK")
</pallas_src>

<mosaic_0001>
module attributes {stable_mosaic.version = 11 : i64} {
  func.func @_fused_kernel(%arg0: memref<40x512xbf16, #tpu.memory_space<vmem>>, %arg1: memref<32x40xbf16, #tpu.memory_space<vmem>>, %arg2: memref<2x32x256xf32, #tpu.memory_space<vmem>>, %arg3: memref<1x2xf32, #tpu.memory_space<vmem>>, %arg4: memref<2x2xf32, #tpu.memory_space<vmem>>) attributes {dimension_semantics = [], scalar_prefetch = 0 : i64, scratch_operands = 0 : i64, tpu.core_type = #tpu.core_type<tc>} {
    %c0 = arith.constant 0 : index
    %c0_0 = arith.constant 0 : index
    %0 = vector.load %arg1[%c0, %c0_0] : memref<32x40xbf16, #tpu.memory_space<vmem>>, vector<32x40xbf16>
    %c0_1 = arith.constant 0 : index
    %c0_2 = arith.constant 0 : index
    %1 = vector.load %arg0[%c0_1, %c0_2] : memref<40x512xbf16, #tpu.memory_space<vmem>>, vector<40x512xbf16>
    %cst = arith.constant dense<0.000000e+00> : vector<32x512xf32>
    %2 = tpu.matmul %0, %1, %cst {dimension_numbers = #tpu.dot_dimension_numbers<[1], [0], [0], [1], [0, 0, 1, 1], [], []>} : vector<32x40xbf16>, vector<40x512xbf16>, vector<32x512xf32> -> vector<32x512xf32>
    %cst_3 = arith.constant 0.000000e+00 : f32
    %3 = vector.broadcast %cst_3 : f32 to vector<32x512xf32>
    %4 = arith.maximumf %2, %3 : vector<32x512xf32>
    %5 = vector.extract_strided_slice %4 {offsets = [0, 0], sizes = [32, 256], strides = [1, 1]} : vector<32x512xf32> to vector<32x256xf32>
    %c0_4 = arith.constant 0 : index
    %c0_5 = arith.constant 0 : index
    %c0_6 = arith.constant 0 : index
    %6 = vector.load %arg2[%c0_4, %c0_5, %c0_6] : memref<2x32x256xf32, #tpu.memory_space<vmem>>, vector<1x32x256xf32>
    %7 = vector.shape_cast %6 : vector<1x32x256xf32> to vector<32x256xf32>
    %8 = arith.mulf %5, %7 : vector<32x256xf32>
    %9 = vector.shape_cast %8 : vector<32x256xf32> to vector<1x32x256xf32>
    %cst_7 = arith.constant dense<0.000000e+00> : vector<1xf32>
    %10 = vector.multi_reduction <add>, %9, %cst_7 [1, 2] : vector<1x32x256xf32> to vector<1xf32>
    %11 = vector.shape_cast %10 : vector<1xf32> to vector<1x1x1xf32>
    %12 = vector.extract %11[0, 0, 0] : f32 from vector<1x1x1xf32>
    %13 = vector.broadcast %12 : f32 to vector<1x1xf32>
    %c1 = arith.constant 1 : index
    %c0_8 = arith.constant 0 : index
    %c0_9 = arith.constant 0 : index
    %14 = vector.load %arg2[%c1, %c0_8, %c0_9] : memref<2x32x256xf32, #tpu.memory_space<vmem>>, vector<1x32x256xf32>
    %15 = vector.shape_cast %14 : vector<1x32x256xf32> to vector<32x256xf32>
    %16 = arith.mulf %5, %15 : vector<32x256xf32>
    %17 = vector.shape_cast %16 : vector<32x256xf32> to vector<1x32x256xf32>
    %cst_10 = arith.constant dense<0.000000e+00> : vector<1xf32>
    %18 = vector.multi_reduction <add>, %17, %cst_10 [1, 2] : vector<1x32x256xf32> to vector<1xf32>
    %19 = vector.shape_cast %18 : vector<1xf32> to vector<1x1x1xf32>
    %20 = vector.extract %19[0, 0, 0] : f32 from vector<1x1x1xf32>
    %21 = vector.broadcast %20 : f32 to vector<1x1xf32>
    %22 = tpu.concatenate %13, %21 in 1 : vector<1x1xf32>, vector<1x1xf32> -> vector<1x2xf32>
    %23 = vector.extract_strided_slice %4 {offsets = [0, 256], sizes = [32, 256], strides = [1, 1]} : vector<32x512xf32> to vector<32x256xf32>
    %c0_11 = arith.constant 0 : index
    %c0_12 = arith.constant 0 : index
    %c0_13 = arith.constant 0 : index
    %24 = vector.load %arg2[%c0_11, %c0_12, %c0_13] : memref<2x32x256xf32, #tpu.memory_space<vmem>>, vector<1x32x256xf32>
    %25 = vector.shape_cast %24 : vector<1x32x256xf32> to vector<32x256xf32>
    %26 = arith.mulf %23, %25 : vector<32x256xf32>
    %27 = vector.shape_cast %26 : vector<32x256xf32> to vector<1x32x256xf32>
    %cst_14 = arith.constant dense<0.000000e+00> : vector<1xf32>
    %28 = vector.multi_reduction <add>, %27, %cst_14 [1, 2] : vector<1x32x256xf32> to vector<1xf32>
    %29 = vector.shape_cast %28 : vector<1xf32> to vector<1x1x1xf32>
    %30 = vector.extract %29[0, 0, 0] : f32 from vector<1x1x1xf32>
    %31 = vector.broadcast %30 : f32 to vector<1x1xf32>
    %c1_15 = arith.constant 1 : index
    %c0_16 = arith.constant 0 : index
    %c0_17 = arith.constant 0 : index
    %32 = vector.load %arg2[%c1_15, %c0_16, %c0_17] : memref<2x32x256xf32, #tpu.memory_space<vmem>>, vector<1x32x256xf32>
    %33 = vector.shape_cast %32 : vector<1x32x256xf32> to vector<32x256xf32>
    %34 = arith.mulf %23, %33 : vector<32x256xf32>
    %35 = vector.shape_cast %34 : vector<32x256xf32> to vector<1x32x256xf32>
    %cst_18 = arith.constant dense<0.000000e+00> : vector<1xf32>
    %36 = vector.multi_reduction <add>, %35, %cst_18 [1, 2] : vector<1x32x256xf32> to vector<1xf32>
    %37 = vector.shape_cast %36 : vector<1xf32> to vector<1x1x1xf32>
    %38 = vector.extract %37[0, 0, 0] : f32 from vector<1x1x1xf32>
    %39 = vector.broadcast %38 : f32 to vector<1x1xf32>
    %40 = tpu.concatenate %31, %39 in 1 : vector<1x1xf32>, vector<1x1xf32> -> vector<1x2xf32>
    %41 = tpu.concatenate %22, %40 in 0 : vector<1x2xf32>, vector<1x2xf32> -> vector<2x2xf32>
    %c0_19 = arith.constant 0 : index
    %c0_20 = arith.constant 0 : index
    %42 = vector.load %arg3[%c0_19, %c0_20] : memref<1x2xf32, #tpu.memory_space<vmem>>, vector<1x2xf32>
    %43 = vector.broadcast %42 : vector<1x2xf32> to vector<2x2xf32>
    %44 = arith.addf %41, %43 : vector<2x2xf32>
    %c0_21 = arith.constant 0 : index
    %c0_22 = arith.constant 0 : index
    %45 = vector.load %arg4[%c0_21, %c0_22] : memref<2x2xf32, #tpu.memory_space<vmem>>, vector<2x2xf32>
    tpu.vector_store %arg4[%c0_21, %c0_22], %44 {strides = array<i32>} : memref<2x2xf32, #tpu.memory_space<vmem>>, vector<2x2xf32>,
    return
  }
}

</mosaic_0001>

<llo_original>
// kernel: self_supervised_task_forward.1
$region0: #{self_supervised_task_forward.1}
  #allocation0 [shape = 'u32[]', space=smem, size = 0x4, offset = 0x4, fixed_abs, tag = 'smem constant byte address 0x4 - core index']
  #allocation1 [shape = 'u32[144,128]{1,0:T(1,128)}', space=vmem, size = 0x12000, scoped, tag = 'internal scratch']
  %s0 = inlined_call_operand.vmem [shape: bf16[40,512], index: 0, kind: input, shape index: {}]
  %s1 = inlined_call_operand.vmem [shape: bf16[32,40], index: 1, kind: input, shape index: {}]
  %s2 = inlined_call_operand.vmem [shape: f32[2,32,256], index: 2, kind: input, shape index: {}]
  %s3 = inlined_call_operand.vmem [shape: f32[1,2], index: 3, kind: input, shape index: {}]
  %s4 = inlined_call_operand.hbm [shape: f32[2,2], index: 4, kind: output, shape index: {}]
  %s5 = sld [smem:[#allocation0]]
  $region26: #{self_supervised_task_forward.1} parent=0
    _
  %s7 = ssub.s32 1, %s5
  %s8 = scalar_select 0, %s7, %s5
  $region1: #{self_supervised_task_forward.1} parent=0
    #allocation2 [shape = 'u8[1024]{0}', space=vmem, size = 0x400, scoped, tag = 'output window, operand 0, single buffered']
    #allocation3 [shape = 's32[1]{0}', space=sflag, size = 0x4, scoped, tag = 'scoped memory for self_supervised_task_forward.1']
    %9 = vsyncpa [#allocation3], 0
    // Predicated region
    $region2: #{self_supervised_task_forward.1} parent=1 // pred_check
      _
    $region3: #{self_supervised_task_forward.1} parent=1 // pred_check_branch
      %11 = sbr.rel (0) target = $region5
    $region4: #{self_supervised_task_forward.1} parent=1 // pred_region
      _
    $region5: #{self_supervised_task_forward.1} parent=1 // pred_fallthru
      _
    // Predicated region
    $region6: #{self_supervised_task_forward.1} parent=1 // pred_check
      _
    $region7: #{self_supervised_task_forward.1} parent=1 // pred_check_branch
      %13 = sbr.rel (0) target = $region9
    $region8: #{self_supervised_task_forward.1} parent=1 // pred_region
      _
    $region9: #{self_supervised_task_forward.1} parent=1 // pred_fallthru
      _
    // Predicated region
    $region10: #{self_supervised_task_forward.1} parent=1 // pred_check
      _
    $region11: #{self_supervised_task_forward.1} parent=1 // pred_check_branch
      %15 = sbr.rel (0) target = $region13
    $region12: #{self_supervised_task_forward.1} parent=1 // pred_region
      _
    $region13: #{self_supervised_task_forward.1} parent=1 // pred_fallthru
      _
    // Predicated region
    $region14: #{self_supervised_task_forward.1} parent=1 // pred_check
      _
    $region15: #{self_supervised_task_forward.1} parent=1 // pred_check_branch
      %17 = sbr.rel (0) target = $region17
    $region16: #{self_supervised_task_forward.1} parent=1 // pred_region
      _
    $region17: #{self_supervised_task_forward.1} parent=1 // pred_fallthru
      _
    %v19 = vld [vmem:[%s1] sm:$0xf]
    %v20 = vld [vmem:[%s1 + $0x4] sm:$0xf]
    %v21 = vld [vmem:[%s1 + $0x8] sm:$0xf]
    %v22 = vld [vmem:[%s1 + $0xc] sm:$0xf]
    %v23 = vld [vmem:[%s0] sm:$0xff]
    %v24 = vld [vmem:[%s0 + $0x8] sm:$0xff]
    %v25 = vld [vmem:[%s0 + $0x10] sm:$0xff]
    %v26 = vld [vmem:[%s0 + $0x18] sm:$0xff]
    %v27 = vld [vmem:[%s0 + $0x20] sm:$0xff]
    %v28 = vld [vmem:[%s0 + $0x28] sm:$0xff]
    %v29 = vld [vmem:[%s0 + $0x30] sm:$0xff]
    %v30 = vld [vmem:[%s0 + $0x38] sm:$0xff]
    %v31 = vld [vmem:[%s0 + $0x40] sm:$0xff]
    %v32 = vld [vmem:[%s0 + $0x48] sm:$0xff]
    %v37 = vunpack.c.l.b16 %v19
    %v38 = vunpack.c.l.b16 %v20
    %v39 = vunpack.c.l.b16 %v21
    %v40 = vunpack.c.l.b16 %v22
    %v41 = vpack.c.b16 %v38, %v37
    %v42 = vpack.c.b16 %v40, %v39
    %v53 = vunpack.c.l.b16 %v23
    %v54 = vunpack.c.h.b16 %v23
    %v55 = vunpack.c.l.b16 %v24
    %v56 = vunpack.c.h.b16 %v24
    %v57 = vunpack.c.l.b16 %v25
    %v58 = vunpack.c.h.b16 %v25
    %v59 = vunpack.c.l.b16 %v26
    %v60 = vunpack.c.h.b16 %v26
    %v61 = vunpack.c.l.b16 %v27
    %v62 = vunpack.c.h.b16 %v27
    %v63 = vunpack.c.l.b16 %v28
    %v64 = vunpack.c.h.b16 %v28
    %v65 = vunpack.c.l.b16 %v29
    %v66 = vunpack.c.h.b16 %v29
    %v67 = vunpack.c.l.b16 %v30
    %v68 = vunpack.c.h.b16 %v30
    %v69 = vunpack.c.l.b16 %v31
    %v70 = vunpack.c.h.b16 %v31
    %v71 = vunpack.c.l.b16 %v32
    %v72 = vunpack.c.h.b16 %v32
    %v73 = vpack.c.b16 %v57, %v53
    %v74 = vpack.c.b16 %v58, %v54
    %v75 = vpack.c.b16 %v59, %v55
    %v76 = vpack.c.b16 %v60, %v56
    %v77 = vpack.c.b16 %v65, %v61
    %v78 = vpack.c.b16 %v66, %v62
    %v79 = vpack.c.b16 %v67, %v63
    %v80 = vpack.c.b16 %v68, %v64
    %v81 = vpack.c.b16 %v69, %v69
    %v82 = vpack.c.b16 %v70, %v70
    %v83 = vpack.c.b16 %v71, %v71
    %v84 = vpack.c.b16 %v72, %v72
    %vm93 = vcmask 326656
    %v95 = vsel %vm93, %v41, 0
    %v98 = vsel %vm93, %v42, 0
    %vm100 = vcmask 1043456
    %v102 = vsel %vm100, %v81, 0
    %v105 = vsel %vm100, %v82, 0
    %v108 = vsel %vm100, %v83, 0
    %v111 = vsel %vm100, %v84, 0
    %113 = vmatprep.subr.bf16.mxu0 0
    %114 = vmatpush1.bf16.msra.mxu0 0
    %115 = vmatprep.subr.bf16.mxu0 0
    %116 = vmatpush1.bf16.msra.mxu0 0
    %117 = vmatprep.subr.bf16.mxu0 0
    %118 = vmatpush1.bf16.msra.mxu0 0
    %119 = vmatprep.subr.bf16.mxu0 0
    %120 = vmatpush1.bf16.msra.mxu0 0
    %121 = vmatprep.subr.bf16.mxu0 0
    %122 = vmatpush1.bf16.msra.mxu0 0
    %123 = vmatprep.subr.bf16.mxu0 %v105
    %124 = vmatpush1.bf16.msra.mxu0 %v102
    %125 = vmatprep.subr.bf16.mxu0 %v78
    %126 = vmatpush1.bf16.msra.mxu0 %v77
    %127 = vmatprep.subr.bf16.mxu0 %v74
    %128 = vmatpush1.bf16.msra.mxu0 %v73
    %129 = vmatprep.subr.bf16.mxu0 0
    %130 = vmatpush2.bf16.msra.mxu0 0
    %131 = vmatprep.subr.bf16.mxu0 0
    %132 = vmatpush2.bf16.msra.mxu0 0
    %133 = vmatprep.subr.bf16.mxu0 0
    %134 = vmatpush2.bf16.msra.mxu0 0
    %135 = vmatprep.subr.bf16.mxu0 0
    %136 = vmatpush2.bf16.msra.mxu0 0
    %137 = vmatprep.subr.bf16.mxu0 0
    %138 = vmatpush2.bf16.msra.mxu0 0
    %139 = vmatprep.subr.bf16.mxu0 0
    %140 = vmatpush2.bf16.msra.mxu0 0
    %141 = vmatprep.subr.bf16.mxu0 0
    %142 = vmatpush2.bf16.msra.mxu0 0
    %143 = vmatprep.subr.bf16.mxu0 0
    %144 = vmatpush2.bf16.msra.mxu0 0
    %145 = vmatprep.mubr.bf16.mxu0 0
    %146 = vmatmul.mubr.bf16.gmra.mxu0 %v95
    %v147 = vpop.f32.mrf.mxu0
    %v148 = vadd.f32 0.0, %v147
    %v149 = vpop.f32.mrf.mxu0
    %v150 = vadd.f32 0.0, %v149
    %v151 = vpop.f32.mrf.mxu0
    %v152 = vadd.f32 0.0, %v151
    %v153 = vpop.f32.mrf.mxu0
    %v154 = vadd.f32 0.0, %v153
    %155 = vmatprep.mubr.bf16.mxu0 0
    %156 = vmatmul.mubr.bf16.gmra.mxu0 %v98
    %v157 = vpop.f32.mrf.mxu0
    %v158 = vadd.f32 0.0, %v157
    %v159 = vpop.f32.mrf.mxu0
    %v160 = vadd.f32 0.0, %v159
    %v161 = vpop.f32.mrf.mxu0
    %v162 = vadd.f32 0.0, %v161
    %v163 = vpop.f32.mrf.mxu0
    %v164 = vadd.f32 0.0, %v163
    %165 = vdwg.mxu0
    %166 = vmatprep.subr.bf16.mxu0 0
    %167 = vmatpush1.bf16.msra.mxu0 0
    %168 = vmatprep.subr.bf16.mxu0 0
    %169 = vmatpush1.bf16.msra.mxu0 0
    %170 = vmatprep.subr.bf16.mxu0 0
    %171 = vmatpush1.bf16.msra.mxu0 0
    %172 = vmatprep.subr.bf16.mxu0 0
    %173 = vmatpush1.bf16.msra.mxu0 0
    %174 = vmatprep.subr.bf16.mxu0 0
    %175 = vmatpush1.bf16.msra.mxu0 0
    %176 = vmatprep.subr.bf16.mxu0 %v111
    %177 = vmatpush1.bf16.msra.mxu0 %v108
    %178 = vmatprep.subr.bf16.mxu0 %v80
    %179 = vmatpush1.bf16.msra.mxu0 %v79
    %180 = vmatprep.subr.bf16.mxu0 %v76
    %181 = vmatpush1.bf16.msra.mxu0 %v75
    %182 = vmatprep.subr.bf16.mxu0 0
    %183 = vmatpush2.bf16.msra.mxu0 0
    %184 = vmatprep.subr.bf16.mxu0 0
    %185 = vmatpush2.bf16.msra.mxu0 0
    %186 = vmatprep.subr.bf16.mxu0 0
    %187 = vmatpush2.bf16.msra.mxu0 0
    %188 = vmatprep.subr.bf16.mxu0 0
    %189 = vmatpush2.bf16.msra.mxu0 0
    %190 = vmatprep.subr.bf16.mxu0 0
    %191 = vmatpush2.bf16.msra.mxu0 0
    %192 = vmatprep.subr.bf16.mxu0 0
    %193 = vmatpush2.bf16.msra.mxu0 0
    %194 = vmatprep.subr.bf16.mxu0 0
    %195 = vmatpush2.bf16.msra.mxu0 0
    %196 = vmatprep.subr.bf16.mxu0 0
    %197 = vmatpush2.bf16.msra.mxu0 0
    %198 = vmatprep.mubr.bf16.mxu0 0
    %199 = vmatmul.mubr.bf16.gmra.mxu0 %v95
    %v200 = vpop.f32.mrf.mxu0
    %v201 = vadd.f32 0.0, %v200
    %v202 = vpop.f32.mrf.mxu0
    %v203 = vadd.f32 0.0, %v202
    %v204 = vpop.f32.mrf.mxu0
    %v205 = vadd.f32 0.0, %v204
    %v206 = vpop.f32.mrf.mxu0
    %v207 = vadd.f32 0.0, %v206
    %208 = vmatprep.mubr.bf16.mxu0 0
    %209 = vmatmul.mubr.bf16.gmra.mxu0 %v98
    %v210 = vpop.f32.mrf.mxu0
    %v211 = vadd.f32 0.0, %v210
    %v212 = vpop.f32.mrf.mxu0
    %v213 = vadd.f32 0.0, %v212
    %v214 = vpop.f32.mrf.mxu0
    %v215 = vadd.f32 0.0, %v214
    %v216 = vpop.f32.mrf.mxu0
    %v217 = vadd.f32 0.0, %v216
    %218 = vdwg.mxu0
    %v219 = vmax.f32 %v148, 0.0
    %v220 = vmax.f32 %v150, 0.0
    %v221 = vmax.f32 %v201, 0.0
    %v222 = vmax.f32 %v203, 0.0
    %v223 = vmax.f32 %v152, 0.0
    %v224 = vmax.f32 %v154, 0.0
    %v225 = vmax.f32 %v205, 0.0
    %v226 = vmax.f32 %v207, 0.0
    %v227 = vmax.f32 %v158, 0.0
    %v228 = vmax.f32 %v160, 0.0
    %v229 = vmax.f32 %v211, 0.0
    %v230 = vmax.f32 %v213, 0.0
    %v231 = vmax.f32 %v162, 0.0
    %v232 = vmax.f32 %v164, 0.0
    %v233 = vmax.f32 %v215, 0.0
    %v234 = vmax.f32 %v217, 0.0
    %v235 = vld [vmem:[%s2] sm:$0xff]
    %v236 = vld [vmem:[%s2 + $0x8] sm:$0xff]
    %v237 = vld [vmem:[%s2 + $0x10] sm:$0xff]
    %v238 = vld [vmem:[%s2 + $0x18] sm:$0xff]
    %v239 = vld [vmem:[%s2 + $0x20] sm:$0xff]
    %v240 = vld [vmem:[%s2 + $0x28] sm:$0xff]
    %v241 = vld [vmem:[%s2 + $0x30] sm:$0xff]
    %v242 = vld [vmem:[%s2 + $0x38] sm:$0xff]
    %v243 = vmul.f32 %v219, %v235
    %v244 = vmul.f32 %v220, %v236
    %v245 = vmul.f32 %v223, %v237
    %v246 = vmul.f32 %v224, %v238
    %v247 = vmul.f32 %v227, %v239
    %v248 = vmul.f32 %v228, %v240
    %v249 = vmul.f32 %v231, %v241
    %v250 = vmul.f32 %v232, %v242
    %v251 = vadd.f32 %v243, %v244
    %v252 = vadd.f32 %v251, %v245
    %v253 = vadd.f32 %v252, %v246
    %v254 = vadd.f32 %v253, %v247
    %v255 = vadd.f32 %v254, %v248
    %v256 = vadd.f32 %v255, %v249
    %v257 = vadd.f32 %v256, %v250
    %258 = vadd.xlane.f32.xlu0 %v257
    %v259 = vpop.xlane.xlu0 %258
    %v260 = vrot.slane %v259, 4
    %v261 = vadd.f32 %v259, %v260
    %v262 = vrot.slane %v261, 2
    %v263 = vadd.f32 %v261, %v262
    %v264 = vrot.slane %v263, 1
    %v265 = vadd.f32 %v263, %v264
    %s266 = vtos %v265
    %v267 = vstv %s266
    %s268 = scalar_lea.vmem %s2, 64
    %v269 = vld [vmem:[%s268] sm:$0xff]
    %v270 = vld [vmem:[%s268 + $0x8] sm:$0xff]
    %v271 = vld [vmem:[%s268 + $0x10] sm:$0xff]
    %v272 = vld [vmem:[%s268 + $0x18] sm:$0xff]
    %v273 = vld [vmem:[%s268 + $0x20] sm:$0xff]
    %v274 = vld [vmem:[%s268 + $0x28] sm:$0xff]
    %v275 = vld [vmem:[%s268 + $0x30] sm:$0xff]
    %v276 = vld [vmem:[%s268 + $0x38] sm:$0xff]
    %v277 = vmul.f32 %v219, %v269
    %v278 = vmul.f32 %v220, %v270
    %v279 = vmul.f32 %v223, %v271
    %v280 = vmul.f32 %v224, %v272
    %v281 = vmul.f32 %v227, %v273
    %v282 = vmul.f32 %v228, %v274
    %v283 = vmul.f32 %v231, %v275
    %v284 = vmul.f32 %v232, %v276
    %v285 = vadd.f32 %v277, %v278
    %v286 = vadd.f32 %v285, %v279
    %v287 = vadd.f32 %v286, %v280
    %v288 = vadd.f32 %v287, %v281
    %v289 = vadd.f32 %v288, %v282
    %v290 = vadd.f32 %v289, %v283
    %v291 = vadd.f32 %v290, %v284
    %292 = vadd.xlane.f32.xlu0 %v291
    %v293 = vpop.xlane.xlu0 %292
    %v294 = vrot.slane %v293, 4
    %v295 = vadd.f32 %v293, %v294
    %v296 = vrot.slane %v295, 2
    %v297 = vadd.f32 %v295, %v296
    %v298 = vrot.slane %v297, 1
    %v299 = vadd.f32 %v297, %v298
    %s300 = vtos %v299
    %v301 = vstv %s300
    %vm302 = vcmask 7168
    %v303 = vsel %vm302, %v267, %v301
    %v304 = vmul.f32 %v221, %v235
    %v305 = vmul.f32 %v222, %v236
    %v306 = vmul.f32 %v225, %v237
    %v307 = vmul.f32 %v226, %v238
    %v308 = vmul.f32 %v229, %v239
    %v309 = vmul.f32 %v230, %v240
    %v310 = vmul.f32 %v233, %v241
    %v311 = vmul.f32 %v234, %v242
    %v312 = vadd.f32 %v304, %v305
    %v313 = vadd.f32 %v312, %v306
    %v314 = vadd.f32 %v313, %v307
    %v315 = vadd.f32 %v314, %v308
    %v316 = vadd.f32 %v315, %v309
    %v317 = vadd.f32 %v316, %v310
    %v318 = vadd.f32 %v317, %v311
    %319 = vadd.xlane.f32.xlu0 %v318
    %v320 = vpop.xlane.xlu0 %319
    %v321 = vrot.slane %v320, 4
    %v322 = vadd.f32 %v320, %v321
    %v323 = vrot.slane %v322, 2
    %v324 = vadd.f32 %v322, %v323
    %v325 = vrot.slane %v324, 1
    %v326 = vadd.f32 %v324, %v325
    %s327 = vtos %v326
    %v328 = vstv %s327
    %v329 = vmul.f32 %v221, %v269
    %v330 = vmul.f32 %v222, %v270
    %v331 = vmul.f32 %v225, %v271
    %v332 = vmul.f32 %v226, %v272
    %v333 = vmul.f32 %v229, %v273
    %v334 = vmul.f32 %v230, %v274
    %v335 = vmul.f32 %v233, %v275
    %v336 = vmul.f32 %v234, %v276
    %v337 = vadd.f32 %v329, %v330
    %v338 = vadd.f32 %v337, %v331
    %v339 = vadd.f32 %v338, %v332
    %v340 = vadd.f32 %v339, %v333
    %v341 = vadd.f32 %v340, %v334
    %v342 = vadd.f32 %v341, %v335
    %v343 = vadd.f32 %v342, %v336
    %344 = vadd.xlane.f32.xlu0 %v343
    %v345 = vpop.xlane.xlu0 %344
    %v346 = vrot.slane %v345, 4
    %v347 = vadd.f32 %v345, %v346
    %v348 = vrot.slane %v347, 2
    %v349 = vadd.f32 %v347, %v348
    %v350 = vrot.slane %v349, 1
    %v351 = vadd.f32 %v349, %v350
    %s352 = vtos %v351
    %v353 = vstv %s352
    %v354 = vsel %vm302, %v328, %v353
    %v356 = vrot.slane %v354, 7
    %vm358 = vcmask 1040384
    %v359 = vsel %vm358, %v303, %v356
    %v360 = vld [vmem:[%s3] sm:$0x1]
    %v362 = vlaneseq
    %v363 = vshrl.u32 %v362, 7
    %v364 = vsub.s32 0, %v363
    %v365 = vrot.slane %v360, %v364
    %v367 = vadd.f32 %v359, %v365
    %vm368 = vcmask 9216
    %369 = vst.msk [vmem:[#allocation2] sm:$0x3] %vm368, %v367
    // Predicated region
    $region18: #{self_supervised_task_forward.1} parent=1 // pred_check
      _
    $region19: #{self_supervised_task_forward.1} parent=1 // pred_check_branch
      %371 = sbr.rel (0) target = $region21
    $region20: #{self_supervised_task_forward.1} parent=1 // pred_region
      %s373 = ssub.s32 32, 32
      %374 = vsyncadd [#allocation3], %s373
      %s376 = sshll.u32 [#allocation2], 4
      %s377 = int_to_ptr.vmem [resolvable:$true] %s376
      %379 = dma.vmem_to_hbm [thread:$0]  %s377, 32, %s4, [#allocation3]
    $region21: #{self_supervised_task_forward.1} parent=1 // pred_fallthru
      _
    // Predicated region
    $region22: #{self_supervised_task_forward.1} parent=1 // pred_check
      _
    $region23: #{self_supervised_task_forward.1} parent=1 // pred_check_branch
      %381 = sbr.rel (0) target = $region25
    $region24: #{self_supervised_task_forward.1} parent=1 // pred_region
      %382 = dma.done [#allocation3], 32
    $region25: #{self_supervised_task_forward.1} parent=1 // pred_fallthru
      _
    %383 = vsyncpa [#allocation3], 1

</llo_original>
